<compile_context>
chip_gen: v6e
topology: v6e:2x2x1
jax: 0.10.0
libtpu: 0.0.40
codegen_flags: <defaults>
</compile_context>

<pallas_src>
import functools

import jax
import jax.numpy as jnp
from jax.experimental import pallas as pl
from jax.experimental.pallas import tpu as pltpu

KSIZE = 3          # Conv1d kernel_size=3
PAD = 1            # padding=1
BN_EPS = 1e-5      # BatchNorm1d default eps
COMPUTE_DTYPE = jnp.float32   # bf16 halves HBM traffic (slight parity loss) -- see TODO


def _resblock_kernel(x_ref, w1s_ref, b1_ref, w2_ref, b2_ref, y_ref, stats_ref,
                     *, bb, L, Cout, Cp):
    """One grid step: bb samples (= bb*L channels-last rows)."""
    rows = bb * L

    def taps(v):
        # v[l-1], v[l], v[l+1] with zeros at each sample's boundary rows (the conv
        # zero-padding).  The boundary mask also cancels any cross-sample leakage
        # from rolling across the concatenated samples.
        r, c = v.shape
        pos = jax.lax.broadcasted_iota(jnp.int32, (r, c), 0) % L
        prev = jnp.where(pos == 0, 0.0, pltpu.roll(v, 1, axis=0))
        nxt = jnp.where(pos == L - 1, 0.0, pltpu.roll(v, r - 1, axis=0))
        return prev, v, nxt

    x = x_ref[...]                                   # (rows, Cin)
    xm, xc, xp = taps(x)

    # conv1 + shortcut fused along N (weights packed at lane offsets 0 and Cp);
    # the three taps accumulate on the MXU.
    z = jnp.dot(xm, w1s_ref[0], preferred_element_type=jnp.float32)
    z = z + jnp.dot(xc, w1s_ref[1], preferred_element_type=jnp.float32)
    z = z + jnp.dot(xp, w1s_ref[2], preferred_element_type=jnp.float32)

    h = jnp.maximum(z[:, 0:Cout] + b1_ref[...], 0.0)     # conv1 + ReLU
    sc = z[:, Cp:Cp + Cout]                              # shortcut conv (bias absorbed by BN)

    hm, hc, hp = taps(h)                                 # conv2 + ReLU
    a = jnp.dot(hm, w2_ref[0], preferred_element_type=jnp.float32)
    a = a + jnp.dot(hc, w2_ref[1], preferred_element_type=jnp.float32)
    a = a + jnp.dot(hp, w2_ref[2], preferred_element_type=jnp.float32)
    h2 = jnp.maximum(a + b2_ref[...], 0.0)

    y = sc + h2                                          # pre-BN residual sum (f32)
    y_ref[...] = y.astype(y_ref.dtype)

    # Per-block BatchNorm partial statistics; combined + inverted in the XLA epilogue.
    stats_ref[0:1, :] = jnp.sum(y, axis=0, keepdims=True)
    stats_ref[1:2, :] = jnp.sum(y * y, axis=0, keepdims=True)


def _pick_batch_block(B, L, Cin, Cout, Cp, target_rows=1024, vmem_budget=24 * 2**20):
    """Largest batch block (in samples) whose bb*L row count stays near the
    512-1024-row tile sweet spot and comfortably fits VMEM when double-buffered."""
    best = None
    for cand in range(1, B + 1):
        if B % cand:
            continue
        rows = cand * L
        if cand != B and rows % 8 != 0:      # partial blocks must obey sublane tiling
            continue
        if rows > max(target_rows, L):       # don't grow past the sweet spot
            continue
        # rough per-step VMEM: double-buffered x & y blocks + in-flight f32 temporaries
        need = 2 * rows * (Cin + Cout) * 4 + rows * (2 * Cp + 6 * Cout) * 4
        if need > vmem_budget:
            continue
        best = cand
    return best if best is not None else B


def residual_block_forward(x_ncl, params):
    """x_ncl: (B, Cin, L) float32 (PyTorch NCL). Returns (B, Cout, L) float32."""
    B, Cin, L = x_ncl.shape
    Cout = params["w1"].shape[0]
    Cp = -(-Cout // 128) * 128   # lane-aligned offset of the fused shortcut half

    # Layout plumbing (one fused XLA pass): NCL -> channels-last rows (B*L, Cin).
    x_rows = jnp.transpose(x_ncl, (0, 2, 1)).reshape(B * L, Cin).astype(COMPUTE_DTYPE)

    # Weights: PyTorch (O, I, K) -> (K, I, O).  conv1 + shortcut packed along N at
    # lane-aligned offsets so the in-kernel split uses only aligned slices.
    w1_t = jnp.transpose(params["w1"], (2, 1, 0)).astype(COMPUTE_DTYPE)   # (3, Cin, Cout)
    ws_t = jnp.transpose(params["ws"], (2, 1, 0)).astype(COMPUTE_DTYPE)   # (3, Cin, Cout)
    w1s = jnp.zeros((KSIZE, Cin, 2 * Cp), COMPUTE_DTYPE)
    w1s = w1s.at[:, :, 0:Cout].set(w1_t).at[:, :, Cp:Cp + Cout].set(ws_t)
    w2_t = jnp.transpose(params["w2"], (2, 1, 0)).astype(COMPUTE_DTYPE)   # (3, Cout, Cout)
    b1 = params["b1"].reshape(1, Cout).astype(jnp.float32)
    b2 = params["b2"].reshape(1, Cout).astype(jnp.float32)

    bb = _pick_batch_block(B, L, Cin, Cout, Cp)
    nb = B // bb
    rows = bb * L
    const = lambda i: (0, 0)
    wmap = lambda i: (0, 0, 0)

    y2, stats = pl.pallas_call(
        functools.partial(_resblock_kernel, bb=bb, L=L, Cout=Cout, Cp=Cp),
        out_shape=(jax.ShapeDtypeStruct((B * L, Cout), COMPUTE_DTYPE),
                   jax.ShapeDtypeStruct((nb, 2, Cout), jnp.float32)),
        grid=(nb,),
        in_specs=[
            pl.BlockSpec((rows, Cin), lambda i: (i, 0)),           # x rows (channels-last)
            pl.BlockSpec((KSIZE, Cin, 2 * Cp), wmap),              # fused conv1+shortcut W
            pl.BlockSpec((1, Cout), const),                        # b1
            pl.BlockSpec((KSIZE, Cout, Cout), wmap),               # w2
            pl.BlockSpec((1, Cout), const),                        # b2
        ],
        out_specs=(
            pl.BlockSpec((rows, Cout), lambda i: (i, 0)),          # pre-BN residual sum y
            pl.BlockSpec((None, 2, Cout), lambda i: (i, 0, 0)),    # per-block BN partials
        ),
        compiler_params=pltpu.CompilerParams(
            # No cross-step state -> batch blocks are independent; on v7x the megacore
            # splits this axis across both TensorCores.
            dimension_semantics=("parallel",),
            # Safe on v7x's 64 MiB VMEM; raise toward ~100 MiB on v5e/v6e if larger
            # batch/L blocks are configured.
            vmem_limit_bytes=48 * 1024 * 1024),
    )(x_rows, w1s, b1, w2_t, b2)

    # BN statistics combine + affine + NCL transpose: tiny XLA ops fused into a single
    # pass over y (replaces the previous pass-2 pallas_call + separate transpose).
    n = B * L
    mean = jnp.sum(stats[:, 0, :], axis=0) / n
    var = jnp.sum(stats[:, 1, :], axis=0) / n - mean * mean   # biased (training-mode BN)
    scale = params["gamma"] * jax.lax.rsqrt(var + BN_EPS)
    shift = params["beta"] - mean * scale
    out_nlc = y2.astype(jnp.float32).reshape(B, L, Cout) * scale + shift
    return jnp.transpose(out_nlc, (0, 2, 1))                  # back to PyTorch NCL


# ---------------- parameter init (deterministic, mirrors module __init__ shapes) -----

def init_params(key, in_channels, out_channels):
    k1, k2, k3, k4, k5, k6 = jax.random.split(key, 6)

    def kaiming_uniform(k, shape, fan_in, gain):
        bound = gain * (3.0 / fan_in) ** 0.5
        return jax.random.uniform(k, shape, jnp.float32, -bound, bound)

    fan1 = in_channels * KSIZE
    fan2 = out_channels * KSIZE
    g_lrelu = 2.0 ** 0.5            # kaiming a=0, leaky_relu
    g_default = (1.0 / 3.0) ** 0.5  # PyTorch Conv default (a=sqrt(5))

    return {
        # self._layers[0]: Conv1d(in, out, 3)
        "w1": kaiming_uniform(k1, (out_channels, in_channels, KSIZE), fan1, g_lrelu),
        "b1": jax.random.uniform(k2, (out_channels,), jnp.float32,
                                 -1.0 / fan1 ** 0.5, 1.0 / fan1 ** 0.5),
        # self._layers[1]: Conv1d(out, out, 3)
        "w2": kaiming_uniform(k3, (out_channels, out_channels, KSIZE), fan2, g_lrelu),
        "b2": jax.random.uniform(k4, (out_channels,), jnp.float32,
                                 -1.0 / fan2 ** 0.5, 1.0 / fan2 ** 0.5),
        # self._shortcut: Conv1d(in, out, 3) (in_channels != out_channels)
        "ws": kaiming_uniform(k5, (out_channels, in_channels, KSIZE), fan1, g_default),
        "bs": jax.random.uniform(k6, (out_channels,), jnp.float32,
                                 -1.0 / fan1 ** 0.5, 1.0 / fan1 ** 0.5),
        # BatchNorm1d(out_channels): weight=1, bias=0 at init
        "gamma": jnp.ones((out_channels,), jnp.float32),
        "beta": jnp.zeros((out_channels,), jnp.float32),
    }


# ---------------- pure-JAX reference (for correctness check) ------------------------

def _conv1d_ref(x_ncl, w, b):
    # x: (B, C, L), w: (O, C, 3), b: (O,) -> (B, O, L); stride=1, padding=1
    return jax.lax.conv_general_dilated(
        x_ncl, w, window_strides=(1,), padding=((PAD, PAD),),
        dimension_numbers=("NCH", "OIH", "NCH")) + b[None, :, None]


def residual_block_ref(x_ncl, p):
    h = jax.nn.relu(_conv1d_ref(x_ncl, p["w1"], p["b1"]))
    h = jax.nn.relu(_conv1d_ref(h, p["w2"], p["b2"]))
    y = _conv1d_ref(x_ncl, p["ws"], p["bs"]) + h
    mean = jnp.mean(y, axis=(0, 2), keepdims=True)
    var = jnp.mean((y - mean) ** 2, axis=(0, 2), keepdims=True)
    return (y - mean) / jnp.sqrt(var + BN_EPS) * p["gamma"][None, :, None] \
        + p["beta"][None, :, None]


if __name__ == "__main__":
    B, Cin, Cout, L = 2, 4, 8, 16
    key = jax.random.PRNGKey(0)
    kx, kp = jax.random.split(key)
    x = jax.random.normal(kx, (B, Cin, L), jnp.float32)
    params = init_params(kp, Cin, Cout)

    fwd = jax.jit(residual_block_forward)
    out = jax.block_until_ready(fwd(x, params))

    ref = jax.block_until_ready(residual_block_ref(x, params))
    assert out.shape == (B, Cout, L)
    err = float(jnp.max(jnp.abs(out - ref)))
    assert err < 2e-4, f"max abs err {err}"

    print("KERNEL_OK")
</pallas_src>

<mosaic_0001>
module attributes {stable_mosaic.version = 11 : i64} {
  func.func @_resblock_kernel(%arg0: i32, %arg1: memref<32x4xf32, #tpu.memory_space<vmem>>, %arg2: memref<3x4x256xf32, #tpu.memory_space<vmem>>, %arg3: memref<1x8xf32, #tpu.memory_space<vmem>>, %arg4: memref<3x8x8xf32, #tpu.memory_space<vmem>>, %arg5: memref<1x8xf32, #tpu.memory_space<vmem>>, %arg6: memref<32x8xf32, #tpu.memory_space<vmem>>, %arg7: memref<1x2x8xf32, #tpu.memory_space<vmem>>) attributes {dimension_semantics = [#tpu.dimension_semantics<parallel>], iteration_bounds = array<i64: 1>, scalar_prefetch = 0 : i64, scratch_operands = 0 : i64, tpu.core_type = #tpu.core_type<tc>, window_params = [{transform_indices = @transform_0, window_bounds = array<i64: 32, 4>}, {pipeline_mode = #tpu.pipeline_mode<synchronous>, transform_indices = @transform_1, window_bounds = array<i64: 3, 4, 256>}, {pipeline_mode = #tpu.pipeline_mode<synchronous>, transform_indices = @transform_2, window_bounds = array<i64: 1, 8>}, {pipeline_mode = #tpu.pipeline_mode<synchronous>, transform_indices = @transform_3, window_bounds = array<i64: 3, 8, 8>}, {pipeline_mode = #tpu.pipeline_mode<synchronous>, transform_indices = @transform_4, window_bounds = array<i64: 1, 8>}, {transform_indices = @transform_5, window_bounds = array<i64: 32, 8>}, {transform_indices = @transform_6, window_bounds = array<i64: 1, 2, 8>}]} {
    %c0 = arith.constant 0 : index
    %c0_0 = arith.constant 0 : index
    %0 = vector.load %arg1[%c0, %c0_0] : memref<32x4xf32, #tpu.memory_space<vmem>>, vector<32x4xf32>
    %1 = tpu.iota {dimensions = array<i32: 0>} : vector<32x4xi32>
    %c16_i32 = arith.constant 16 : i32
    %c0_i32 = arith.constant 0 : i32
    %2 = arith.cmpi eq, %c16_i32, %c0_i32 : i32
    %c1_i32 = arith.constant 1 : i32
    %3 = arith.select %2, %c1_i32, %c16_i32 : i32
    %4 = vector.broadcast %3 : i32 to vector<32x4xi32>
    %5 = arith.remsi %1, %4 : vector<32x4xi32>
    %c0_i32_1 = arith.constant 0 : i32
    %6 = vector.broadcast %c0_i32_1 : i32 to vector<32x4xi32>
    %7 = arith.cmpi ne, %5, %6 : vector<32x4xi32>
    %c0_i32_2 = arith.constant 0 : i32
    %8 = vector.broadcast %c0_i32_2 : i32 to vector<32x4xi32>
    %9 = arith.cmpi slt, %5, %8 : vector<32x4xi32>
    %c0_i32_3 = arith.constant 0 : i32
    %10 = arith.cmpi slt, %3, %c0_i32_3 : i32
    %11 = vector.broadcast %10 : i1 to vector<32x4xi1>
    %12 = vector.broadcast %11 : vector<32x4xi1> to vector<32x4xi1>
    %13 = arith.xori %9, %12 : vector<32x4xi1>
    %14 = arith.andi %13, %7 : vector<32x4xi1>
    %15 = vector.broadcast %3 : i32 to vector<32x4xi32>
    %16 = arith.addi %5, %15 : vector<32x4xi32>
    %17 = arith.select %14, %16, %5 : vector<32x4xi1>, vector<32x4xi32>
    %c0_i32_4 = arith.constant 0 : i32
    %18 = vector.broadcast %c0_i32_4 : i32 to vector<32x4xi32>
    %19 = arith.cmpi eq, %17, %18 : vector<32x4xi32>
    %c1_i32_5 = arith.constant 1 : i32
    %20 = tpu.dynamic_rotate %0 by %c1_i32_5 dim 0 : vector<32x4xf32>, i32 -> vector<32x4xf32>
    %cst = arith.constant 0.000000e+00 : f32
    %21 = vector.broadcast %cst : f32 to vector<32x4xf32>
    %22 = arith.select %19, %21, %20 : vector<32x4xi1>, vector<32x4xf32>
    %c15_i32 = arith.constant 15 : i32
    %23 = vector.broadcast %c15_i32 : i32 to vector<32x4xi32>
    %24 = arith.cmpi eq, %17, %23 : vector<32x4xi32>
    %c31_i32 = arith.constant 31 : i32
    %25 = tpu.dynamic_rotate %0 by %c31_i32 dim 0 : vector<32x4xf32>, i32 -> vector<32x4xf32>
    %cst_6 = arith.constant 0.000000e+00 : f32
    %26 = vector.broadcast %cst_6 : f32 to vector<32x4xf32>
    %27 = arith.select %24, %26, %25 : vector<32x4xi1>, vector<32x4xf32>
    %c0_7 = arith.constant 0 : index
    %c0_8 = arith.constant 0 : index
    %c0_9 = arith.constant 0 : index
    %28 = vector.load %arg2[%c0_7, %c0_8, %c0_9] : memref<3x4x256xf32, #tpu.memory_space<vmem>>, vector<1x4x256xf32>
    %29 = vector.shape_cast %28 : vector<1x4x256xf32> to vector<4x256xf32>
    %cst_10 = arith.constant dense<0.000000e+00> : vector<32x256xf32>
    %30 = tpu.matmul %22, %29, %cst_10 {dimension_numbers = #tpu.dot_dimension_numbers<[1], [0], [0], [1], [0, 0, 1, 1], [], []>} : vector<32x4xf32>, vector<4x256xf32>, vector<32x256xf32> -> vector<32x256xf32>
    %c1 = arith.constant 1 : index
    %c0_11 = arith.constant 0 : index
    %c0_12 = arith.constant 0 : index
    %31 = vector.load %arg2[%c1, %c0_11, %c0_12] : memref<3x4x256xf32, #tpu.memory_space<vmem>>, vector<1x4x256xf32>
    %32 = vector.shape_cast %31 : vector<1x4x256xf32> to vector<4x256xf32>
    %cst_13 = arith.constant dense<0.000000e+00> : vector<32x256xf32>
    %33 = tpu.matmul %0, %32, %cst_13 {dimension_numbers = #tpu.dot_dimension_numbers<[1], [0], [0], [1], [0, 0, 1, 1], [], []>} : vector<32x4xf32>, vector<4x256xf32>, vector<32x256xf32> -> vector<32x256xf32>
    %34 = arith.addf %30, %33 : vector<32x256xf32>
    %c2 = arith.constant 2 : index
    %c0_14 = arith.constant 0 : index
    %c0_15 = arith.constant 0 : index
    %35 = vector.load %arg2[%c2, %c0_14, %c0_15] : memref<3x4x256xf32, #tpu.memory_space<vmem>>, vector<1x4x256xf32>
    %36 = vector.shape_cast %35 : vector<1x4x256xf32> to vector<4x256xf32>
    %cst_16 = arith.constant dense<0.000000e+00> : vector<32x256xf32>
    %37 = tpu.matmul %27, %36, %cst_16 {dimension_numbers = #tpu.dot_dimension_numbers<[1], [0], [0], [1], [0, 0, 1, 1], [], []>} : vector<32x4xf32>, vector<4x256xf32>, vector<32x256xf32> -> vector<32x256xf32>
    %38 = arith.addf %34, %37 : vector<32x256xf32>
    %39 = vector.extract_strided_slice %38 {offsets = [0, 0], sizes = [32, 8], strides = [1, 1]} : vector<32x256xf32> to vector<32x8xf32>
    %c0_17 = arith.constant 0 : index
    %c0_18 = arith.constant 0 : index
    %40 = vector.load %arg3[%c0_17, %c0_18] : memref<1x8xf32, #tpu.memory_space<vmem>>, vector<1x8xf32>
    %41 = vector.broadcast %40 : vector<1x8xf32> to vector<32x8xf32>
    %42 = arith.addf %39, %41 : vector<32x8xf32>
    %cst_19 = arith.constant 0.000000e+00 : f32
    %43 = vector.broadcast %cst_19 : f32 to vector<32x8xf32>
    %44 = arith.maximumf %42, %43 : vector<32x8xf32>
    %45 = vector.extract_strided_slice %38 {offsets = [0, 128], sizes = [32, 8], strides = [1, 1]} : vector<32x256xf32> to vector<32x8xf32>
    %46 = tpu.iota {dimensions = array<i32: 0>} : vector<32x8xi32>
    %c16_i32_20 = arith.constant 16 : i32
    %c0_i32_21 = arith.constant 0 : i32
    %47 = arith.cmpi eq, %c16_i32_20, %c0_i32_21 : i32
    %c1_i32_22 = arith.constant 1 : i32
    %48 = arith.select %47, %c1_i32_22, %c16_i32_20 : i32
    %49 = vector.broadcast %48 : i32 to vector<32x8xi32>
    %50 = arith.remsi %46, %49 : vector<32x8xi32>
    %c0_i32_23 = arith.constant 0 : i32
    %51 = vector.broadcast %c0_i32_23 : i32 to vector<32x8xi32>
    %52 = arith.cmpi ne, %50, %51 : vector<32x8xi32>
    %c0_i32_24 = arith.constant 0 : i32
    %53 = vector.broadcast %c0_i32_24 : i32 to vector<32x8xi32>
    %54 = arith.cmpi slt, %50, %53 : vector<32x8xi32>
    %c0_i32_25 = arith.constant 0 : i32
    %55 = arith.cmpi slt, %48, %c0_i32_25 : i32
    %56 = vector.broadcast %55 : i1 to vector<32x8xi1>
    %57 = vector.broadcast %56 : vector<32x8xi1> to vector<32x8xi1>
    %58 = arith.xori %54, %57 : vector<32x8xi1>
    %59 = arith.andi %58, %52 : vector<32x8xi1>
    %60 = vector.broadcast %48 : i32 to vector<32x8xi32>
    %61 = arith.addi %50, %60 : vector<32x8xi32>
    %62 = arith.select %59, %61, %50 : vector<32x8xi1>, vector<32x8xi32>
    %c0_i32_26 = arith.constant 0 : i32
    %63 = vector.broadcast %c0_i32_26 : i32 to vector<32x8xi32>
    %64 = arith.cmpi eq, %62, %63 : vector<32x8xi32>
    %c1_i32_27 = arith.constant 1 : i32
    %65 = tpu.dynamic_rotate %44 by %c1_i32_27 dim 0 : vector<32x8xf32>, i32 -> vector<32x8xf32>
    %cst_28 = arith.constant 0.000000e+00 : f32
    %66 = vector.broadcast %cst_28 : f32 to vector<32x8xf32>
    %67 = arith.select %64, %66, %65 : vector<32x8xi1>, vector<32x8xf32>
    %c15_i32_29 = arith.constant 15 : i32
    %68 = vector.broadcast %c15_i32_29 : i32 to vector<32x8xi32>
    %69 = arith.cmpi eq, %62, %68 : vector<32x8xi32>
    %c31_i32_30 = arith.constant 31 : i32
    %70 = tpu.dynamic_rotate %44 by %c31_i32_30 dim 0 : vector<32x8xf32>, i32 -> vector<32x8xf32>
    %cst_31 = arith.constant 0.000000e+00 : f32
    %71 = vector.broadcast %cst_31 : f32 to vector<32x8xf32>
    %72 = arith.select %69, %71, %70 : vector<32x8xi1>, vector<32x8xf32>
    %c0_32 = arith.constant 0 : index
    %c0_33 = arith.constant 0 : index
    %c0_34 = arith.constant 0 : index
    %73 = vector.load %arg4[%c0_32, %c0_33, %c0_34] : memref<3x8x8xf32, #tpu.memory_space<vmem>>, vector<1x8x8xf32>
    %74 = vector.shape_cast %73 : vector<1x8x8xf32> to vector<8x8xf32>
    %cst_35 = arith.constant dense<0.000000e+00> : vector<32x8xf32>
    %75 = tpu.matmul %67, %74, %cst_35 {dimension_numbers = #tpu.dot_dimension_numbers<[1], [0], [0], [1], [0, 0, 1, 1], [], []>} : vector<32x8xf32>, vector<8x8xf32>, vector<32x8xf32> -> vector<32x8xf32>
    %c1_36 = arith.constant 1 : index
    %c0_37 = arith.constant 0 : index
    %c0_38 = arith.constant 0 : index
    %76 = vector.load %arg4[%c1_36, %c0_37, %c0_38] : memref<3x8x8xf32, #tpu.memory_space<vmem>>, vector<1x8x8xf32>
    %77 = vector.shape_cast %76 : vector<1x8x8xf32> to vector<8x8xf32>
    %cst_39 = arith.constant dense<0.000000e+00> : vector<32x8xf32>
    %78 = tpu.matmul %44, %77, %cst_39 {dimension_numbers = #tpu.dot_dimension_numbers<[1], [0], [0], [1], [0, 0, 1, 1], [], []>} : vector<32x8xf32>, vector<8x8xf32>, vector<32x8xf32> -> vector<32x8xf32>
    %79 = arith.addf %75, %78 : vector<32x8xf32>
    %c2_40 = arith.constant 2 : index
    %c0_41 = arith.constant 0 : index
    %c0_42 = arith.constant 0 : index
    %80 = vector.load %arg4[%c2_40, %c0_41, %c0_42] : memref<3x8x8xf32, #tpu.memory_space<vmem>>, vector<1x8x8xf32>
    %81 = vector.shape_cast %80 : vector<1x8x8xf32> to vector<8x8xf32>
    %cst_43 = arith.constant dense<0.000000e+00> : vector<32x8xf32>
    %82 = tpu.matmul %72, %81, %cst_43 {dimension_numbers = #tpu.dot_dimension_numbers<[1], [0], [0], [1], [0, 0, 1, 1], [], []>} : vector<32x8xf32>, vector<8x8xf32>, vector<32x8xf32> -> vector<32x8xf32>
    %83 = arith.addf %79, %82 : vector<32x8xf32>
    %c0_44 = arith.constant 0 : index
    %c0_45 = arith.constant 0 : index
    %84 = vector.load %arg5[%c0_44, %c0_45] : memref<1x8xf32, #tpu.memory_space<vmem>>, vector<1x8xf32>
    %85 = vector.broadcast %84 : vector<1x8xf32> to vector<32x8xf32>
    %86 = arith.addf %83, %85 : vector<32x8xf32>
    %cst_46 = arith.constant 0.000000e+00 : f32
    %87 = vector.broadcast %cst_46 : f32 to vector<32x8xf32>
    %88 = arith.maximumf %86, %87 : vector<32x8xf32>
    %89 = arith.addf %45, %88 : vector<32x8xf32>
    %c0_47 = arith.constant 0 : index
    %c0_48 = arith.constant 0 : index
    %90 = vector.load %arg6[%c0_47, %c0_48] : memref<32x8xf32, #tpu.memory_space<vmem>>, vector<32x8xf32>
    tpu.vector_store %arg6[%c0_47, %c0_48], %89 {strides = array<i32>} : memref<32x8xf32, #tpu.memory_space<vmem>>, vector<32x8xf32>,
    %cst_49 = arith.constant dense<0.000000e+00> : vector<8xf32>
    %91 = vector.multi_reduction <add>, %89, %cst_49 [0] : vector<32x8xf32> to vector<8xf32>
    %92 = vector.shape_cast %91 : vector<8xf32> to vector<1x8xf32>
    %c0_50 = arith.constant 0 : index
    %c0_51 = arith.constant 0 : index
    %c0_52 = arith.constant 0 : index
    %93 = vector.load %arg7[%c0_50, %c0_51, %c0_52] : memref<1x2x8xf32, #tpu.memory_space<vmem>>, vector<1x1x8xf32>
    %94 = vector.shape_cast %93 : vector<1x1x8xf32> to vector<1x8xf32>
    %95 = vector.shape_cast %92 : vector<1x8xf32> to vector<1x1x8xf32>
    tpu.vector_store %arg7[%c0_50, %c0_51, %c0_52], %95 {strides = array<i32>} : memref<1x2x8xf32, #tpu.memory_space<vmem>>, vector<1x1x8xf32>,
    %96 = arith.mulf %89, %89 : vector<32x8xf32>
    %cst_53 = arith.constant dense<0.000000e+00> : vector<8xf32>
    %97 = vector.multi_reduction <add>, %96, %cst_53 [0] : vector<32x8xf32> to vector<8xf32>
    %98 = vector.shape_cast %97 : vector<8xf32> to vector<1x8xf32>
    %c0_54 = arith.constant 0 : index
    %c1_55 = arith.constant 1 : index
    %c0_56 = arith.constant 0 : index
    %99 = vector.load %arg7[%c0_54, %c1_55, %c0_56] : memref<1x2x8xf32, #tpu.memory_space<vmem>>, vector<1x1x8xf32>
    %100 = vector.shape_cast %99 : vector<1x1x8xf32> to vector<1x8xf32>
    %101 = vector.shape_cast %98 : vector<1x8xf32> to vector<1x1x8xf32>
    tpu.vector_store %arg7[%c0_54, %c1_55, %c0_56], %101 {strides = array<i32>} : memref<1x2x8xf32, #tpu.memory_space<vmem>>, vector<1x1x8xf32>,
    return
  }
  func.func @transform_0(%arg0: i32) -> (i32, i32) {
    %c0_i32 = arith.constant 0 : i32
    %c0_i32_0 = arith.constant 0 : i32
    return %arg0, %c0_i32 : i32, i32
  }
  func.func @transform_1(%arg0: i32) -> (i32, i32, i32) {
    %c0_i32 = arith.constant 0 : i32
    %c0_i32_0 = arith.constant 0 : i32
    %c0_i32_1 = arith.constant 0 : i32
    %c0_i32_2 = arith.constant 0 : i32
    return %c0_i32, %c0_i32_0, %c0_i32_1 : i32, i32, i32
  }
  func.func @transform_2(%arg0: i32) -> (i32, i32) {
    %c0_i32 = arith.constant 0 : i32
    %c0_i32_0 = arith.constant 0 : i32
    %c0_i32_1 = arith.constant 0 : i32
    return %c0_i32, %c0_i32_0 : i32, i32
  }
  func.func @transform_3(%arg0: i32) -> (i32, i32, i32) {
    %c0_i32 = arith.constant 0 : i32
    %c0_i32_0 = arith.constant 0 : i32
    %c0_i32_1 = arith.constant 0 : i32
    %c0_i32_2 = arith.constant 0 : i32
    return %c0_i32, %c0_i32_0, %c0_i32_1 : i32, i32, i32
  }
  func.func @transform_4(%arg0: i32) -> (i32, i32) {
    %c0_i32 = arith.constant 0 : i32
    %c0_i32_0 = arith.constant 0 : i32
    %c0_i32_1 = arith.constant 0 : i32
    return %c0_i32, %c0_i32_0 : i32, i32
  }
  func.func @transform_5(%arg0: i32) -> (i32, i32) {
    %c0_i32 = arith.constant 0 : i32
    %c0_i32_0 = arith.constant 0 : i32
    return %arg0, %c0_i32 : i32, i32
  }
  func.func @transform_6(%arg0: i32) -> (i32, i32, i32) {
    %c0_i32 = arith.constant 0 : i32
    %c0_i32_0 = arith.constant 0 : i32
    %c0_i32_1 = arith.constant 0 : i32
    return %arg0, %c0_i32, %c0_i32_0 : i32, i32, i32
  }
}

</mosaic_0001>

<llo_original>
// kernel: residual_block_forward.1
$region0: #{residual_block_forward.1}
  #allocation0 [shape = 'u32[]', space=smem, size = 0x4, offset = 0x4, fixed_abs, tag = 'smem constant byte address 0x4 - core index']
  #allocation1 [shape = 'u32[144,128]{1,0:T(1,128)}', space=vmem, size = 0x12000, scoped, tag = 'internal scratch']
  %s0 = inlined_call_operand.vmem [shape: f32[32,4], index: 0, kind: input, shape index: {}]
  %s1 = inlined_call_operand.vmem [shape: f32[3,4,256], index: 1, kind: input, shape index: {}]
  %s2 = inlined_call_operand.vmem [shape: f32[1,8], index: 2, kind: input, shape index: {}]
  %s3 = inlined_call_operand.vmem [shape: f32[3,8,8], index: 3, kind: input, shape index: {}]
  %s4 = inlined_call_operand.vmem [shape: f32[1,8], index: 4, kind: input, shape index: {}]
  %s5 = inlined_call_operand.vmem [shape: f32[32,8], index: 5, kind: output, shape index: {0}]
  %s6 = inlined_call_operand.vmem [shape: f32[1,2,8], index: 6, kind: output, shape index: {1}]
  %7 = xla_tuple %s5, %s6
  %s8 = sld [smem:[#allocation0]]
  $region38: #{residual_block_forward.1} parent=0
    _
  %s10 = ssub.s32 1, %s8
  %s11 = scalar_select 0, %s10, %s8
  // Predicated region
  $region2: #{residual_block_forward.1} parent=0 // pred_check
    _
  $region3: #{residual_block_forward.1} parent=0 // pred_check_branch
    %13 = sbr.rel (0) target = $region5
  $region4: #{residual_block_forward.1} parent=0 // pred_region
    _
  $region5: #{residual_block_forward.1} parent=0 // pred_fallthru
    _
  // Predicated region
  $region6: #{residual_block_forward.1} parent=0 // pred_check
    _
  $region7: #{residual_block_forward.1} parent=0 // pred_check_branch
    %15 = sbr.rel (0) target = $region9
  $region8: #{residual_block_forward.1} parent=0 // pred_region
    _
  $region9: #{residual_block_forward.1} parent=0 // pred_fallthru
    _
  // Predicated region
  $region10: #{residual_block_forward.1} parent=0 // pred_check
    _
  $region11: #{residual_block_forward.1} parent=0 // pred_check_branch
    %17 = sbr.rel (0) target = $region13
  $region12: #{residual_block_forward.1} parent=0 // pred_region
    _
  $region13: #{residual_block_forward.1} parent=0 // pred_fallthru
    _
  // Predicated region
  $region14: #{residual_block_forward.1} parent=0 // pred_check
    _
  $region15: #{residual_block_forward.1} parent=0 // pred_check_branch
    %19 = sbr.rel (0) target = $region17
  $region16: #{residual_block_forward.1} parent=0 // pred_region
    _
  $region17: #{residual_block_forward.1} parent=0 // pred_fallthru
    _
  // Predicated region
  $region18: #{residual_block_forward.1} parent=0 // pred_check
    _
  $region19: #{residual_block_forward.1} parent=0 // pred_check_branch
    %21 = sbr.rel (0) target = $region21
  $region20: #{residual_block_forward.1} parent=0 // pred_region
    _
  $region21: #{residual_block_forward.1} parent=0 // pred_fallthru
    _
  %v22 = vld [vmem:[%s0] sm:$0xff]
  %v23 = vld [vmem:[%s0 + $0x8] sm:$0xff]
  %v24 = vld [vmem:[%s0 + $0x10] sm:$0xff]
  %v25 = vld [vmem:[%s0 + $0x18] sm:$0xff]
  %v26 = vlaneseq
  %v27 = vshrl.u32 %v26, 7
  %v28 = vadd.s32 %v27, 8
  %v29 = vadd.s32 %v27, 16
  %v30 = vadd.s32 %v27, 24
  %vm31 = vcmp.lt.s32.totalorder %v27, 0
  %v32 = vsub.s32 0, %v27
  %v33 = vsel %vm31, %v32, %v27
  %v34 = vshrl.u32 %v33, 4
  %v35 = vand.u32 %v33, 15
  %v36 = vsub.s32 0, %v35
  %v37 = vsel %vm31, %v36, %v35
  %vm38 = vcmp.lt.s32.totalorder %v28, 0
  %v39 = vsub.s32 0, %v28
  %v40 = vsel %vm38, %v39, %v28
  %v41 = vshrl.u32 %v40, 4
  %v42 = vand.u32 %v40, 15
  %v43 = vsub.s32 0, %v42
  %v44 = vsel %vm38, %v43, %v42
  %vm45 = vcmp.lt.s32.totalorder %v29, 0
  %v46 = vsub.s32 0, %v29
  %v47 = vsel %vm45, %v46, %v29
  %v48 = vshrl.u32 %v47, 4
  %v49 = vand.u32 %v47, 15
  %v50 = vsub.s32 0, %v49
  %v51 = vsel %vm45, %v50, %v49
  %vm52 = vcmp.lt.s32.totalorder %v30, 0
  %v53 = vsub.s32 0, %v30
  %v54 = vsel %vm52, %v53, %v30
  %v55 = vshrl.u32 %v54, 4
  %v56 = vand.u32 %v54, 15
  %v57 = vsub.s32 0, %v56
  %v58 = vsel %vm52, %v57, %v56
  %vm59 = vcmp.ne.s32.totalorder %v37, 0
  %vm60 = vcmp.ne.s32.totalorder %v44, 0
  %vm61 = vcmp.ne.s32.totalorder %v51, 0
  %vm62 = vcmp.ne.s32.totalorder %v58, 0
  %vm63 = vcmp.lt.s32.totalorder %v37, 0
  %vm64 = vcmp.lt.s32.totalorder %v44, 0
  %vm65 = vcmp.lt.s32.totalorder %v51, 0
  %vm66 = vcmp.lt.s32.totalorder %v58, 0
  %vm67 = vmand %vm63, %vm59
  %vm68 = vmand %vm64, %vm60
  %vm69 = vmand %vm65, %vm61
  %vm70 = vmand %vm66, %vm62
  %v71 = vadd.s32 %v37, 16
  %v72 = vadd.s32 %v44, 16
  %v73 = vadd.s32 %v51, 16
  %v74 = vadd.s32 %v58, 16
  %v75 = vsel %vm67, %v71, %v37
  %v76 = vsel %vm68, %v72, %v44
  %v77 = vsel %vm69, %v73, %v51
  %v78 = vsel %vm70, %v74, %v58
  %vm79 = vcmp.eq.s32.totalorder %v75, 0
  %vm80 = vcmp.eq.s32.totalorder %v76, 0
  %vm81 = vcmp.eq.s32.totalorder %v77, 0
  %vm82 = vcmp.eq.s32.totalorder %v78, 0
  %v83 = vrot.slane %v22, 7
  %v84 = vrot.slane %v23, 7
  %v85 = vrot.slane %v24, 7
  %v86 = vrot.slane %v25, 7
  %vm87 = vcmp.lt.s32.totalorder %v27, 1
  %v88 = vsel %vm87, %v85, %v86
  %v89 = vsel %vm87, %v84, %v85
  %v90 = vsel %vm87, %v83, %v84
  %v91 = vsel %vm87, %v86, %v83
  %v92 = vsel %vm79, 0.0, %v91
  %v93 = vsel %vm80, 0.0, %v90
  %v94 = vsel %vm81, 0.0, %v89
  %v95 = vsel %vm82, 0.0, %v88
  %vm96 = vcmp.eq.s32.totalorder %v75, 15
  %vm97 = vcmp.eq.s32.totalorder %v76, 15
  %vm98 = vcmp.eq.s32.totalorder %v77, 15
  %vm99 = vcmp.eq.s32.totalorder %v78, 15
  %v100 = vrot.slane %v22, 1
  %v101 = vrot.slane %v23, 1
  %v102 = vrot.slane %v24, 1
  %v103 = vrot.slane %v25, 1
  %vm104 = vcmp.lt.s32.totalorder %v27, 7
  %v105 = vsel %vm104, %v102, %v103
  %v106 = vsel %vm104, %v101, %v102
  %v107 = vsel %vm104, %v100, %v101
  %v108 = vsel %vm104, %v103, %v100
  %v109 = vsel %vm96, 0.0, %v107
  %v110 = vsel %vm97, 0.0, %v106
  %v111 = vsel %vm98, 0.0, %v105
  %v112 = vsel %vm99, 0.0, %v108
  %v113 = vld [vmem:[%s1] sm:$0xff]
  %s114 = scalar_lea.vmem %s1, 8
  %v115 = vld [vmem:[%s114] sm:$0xff]
  %v117 = vcombine.high %v115, %v115
  %vm118 = vcmask 31744
  %v120 = vsel %vm118, %v22, 0
  %v123 = vsel %vm118, %v23, 0
  %v126 = vsel %vm118, %v24, 0
  %v129 = vsel %vm118, %v25, 0
  %vm131 = vcmask 1043456
  %v132 = vsel %vm131, %v115, 0
  %v134 = vsel %vm131, %v117, 0
  %136 = vmatprep.subr.mxu0 0.0
  %137 = vmatpush1.msra.mxu0 0.0
  %138 = vmatprep.subr.mxu0 0.0
  %139 = vmatpush1.msra.mxu0 0.0
  %140 = vmatprep.subr.mxu0 0.0
  %141 = vmatpush1.msra.mxu0 0.0
  %142 = vmatprep.subr.mxu0 0.0
  %143 = vmatpush1.msra.mxu0 0.0
  %144 = vmatprep.subr.mxu0 0.0
  %145 = vmatpush1.msra.mxu0 0.0
  %146 = vmatprep.subr.mxu0 0.0
  %147 = vmatpush1.msra.mxu0 0.0
  %148 = vmatprep.subr.mxu0 0.0
  %149 = vmatpush1.msra.mxu0 0.0
  %150 = vmatprep.subr.mxu0 0.0
  %151 = vmatpush1.msra.mxu0 0.0
  %152 = vmatprep.subr.mxu0 0.0
  %153 = vmatpush1.msra.mxu0 0.0
  %154 = vmatprep.subr.mxu0 0.0
  %155 = vmatpush1.msra.mxu0 0.0
  %156 = vmatprep.subr.mxu0 0.0
  %157 = vmatpush1.msra.mxu0 0.0
  %158 = vmatprep.subr.mxu0 0.0
  %159 = vmatpush1.msra.mxu0 0.0
  %160 = vmatprep.subr.mxu0 0.0
  %161 = vmatpush1.msra.mxu0 0.0
  %162 = vmatprep.subr.mxu0 0.0
  %163 = vmatpush1.msra.mxu0 0.0
  %164 = vmatprep.subr.mxu0 0.0
  %165 = vmatpush1.msra.mxu0 0.0
  %166 = vmatprep.subr.mxu0 %v134
  %167 = vmatpush1.msra.mxu0 %v132
  %168 = vmatprep.subr.mxu0 0.0
  %169 = vmatpush2.msra.mxu0 0.0
  %170 = vmatprep.subr.mxu0 0.0
  %171 = vmatpush2.msra.mxu0 0.0
  %172 = vmatprep.subr.mxu0 0.0
  %173 = vmatpush2.msra.mxu0 0.0
  %174 = vmatprep.subr.mxu0 0.0
  %175 = vmatpush2.msra.mxu0 0.0
  %176 = vmatprep.subr.mxu0 0.0
  %177 = vmatpush2.msra.mxu0 0.0
  %178 = vmatprep.subr.mxu0 0.0
  %179 = vmatpush2.msra.mxu0 0.0
  %180 = vmatprep.subr.mxu0 0.0
  %181 = vmatpush2.msra.mxu0 0.0
  %182 = vmatprep.subr.mxu0 0.0
  %183 = vmatpush2.msra.mxu0 0.0
  %184 = vmatprep.subr.mxu0 0.0
  %185 = vmatpush2.msra.mxu0 0.0
  %186 = vmatprep.subr.mxu0 0.0
  %187 = vmatpush2.msra.mxu0 0.0
  %188 = vmatprep.subr.mxu0 0.0
  %189 = vmatpush2.msra.mxu0 0.0
  %190 = vmatprep.subr.mxu0 0.0
  %191 = vmatpush2.msra.mxu0 0.0
  %192 = vmatprep.subr.mxu0 0.0
  %193 = vmatpush2.msra.mxu0 0.0
  %194 = vmatprep.subr.mxu0 0.0
  %195 = vmatpush2.msra.mxu0 0.0
  %196 = vmatprep.subr.mxu0 0.0
  %197 = vmatpush2.msra.mxu0 0.0
  %198 = vmatprep.subr.mxu0 0.0
  %199 = vmatpush2.msra.mxu0 0.0
  %200 = vmatprep.mubr.f32.mxu0 0.0
  %201 = vmatmul.mubr.f32.gmra.mxu0 %v120
  %v202 = vpop.f32.mrf.mxu0
  %v203 = vadd.f32 0.0, %v202
  %v204 = vpop.f32.mrf.mxu0
  %v205 = vadd.f32 0.0, %v204
  %206 = vmatprep.mubr.f32.mxu0 0.0
  %207 = vmatmul.mubr.f32.gmra.mxu0 %v123
  %v208 = vpop.f32.mrf.mxu0
  %v209 = vadd.f32 0.0, %v208
  %v210 = vpop.f32.mrf.mxu0
  %v211 = vadd.f32 0.0, %v210
  %212 = vmatprep.mubr.f32.mxu0 0.0
  %213 = vmatmul.mubr.f32.gmra.mxu0 %v126
  %v214 = vpop.f32.mrf.mxu0
  %v215 = vadd.f32 0.0, %v214
  %v216 = vpop.f32.mrf.mxu0
  %v217 = vadd.f32 0.0, %v216
  %218 = vmatprep.mubr.f32.mxu0 0.0
  %219 = vmatmul.mubr.f32.gmra.mxu0 %v129
  %v220 = vpop.f32.mrf.mxu0
  %v221 = vadd.f32 0.0, %v220
  %v222 = vpop.f32.mrf.mxu0
  %v223 = vadd.f32 0.0, %v222
  %224 = vdwg.mxu0
  %v226 = vcombine.high %v113, %v113
  %v228 = vsel %vm118, %v92, 0
  %v231 = vsel %vm118, %v93, 0
  %v234 = vsel %vm118, %v94, 0
  %v237 = vsel %vm118, %v95, 0
  %v239 = vsel %vm131, %v113, 0
  %v241 = vsel %vm131, %v226, 0
  %243 = vmatprep.subr.mxu0 0.0
  %244 = vmatpush1.msra.mxu0 0.0
  %245 = vmatprep.subr.mxu0 0.0
  %246 = vmatpush1.msra.mxu0 0.0
  %247 = vmatprep.subr.mxu0 0.0
  %248 = vmatpush1.msra.mxu0 0.0
  %249 = vmatprep.subr.mxu0 0.0
  %250 = vmatpush1.msra.mxu0 0.0
  %251 = vmatprep.subr.mxu0 0.0
  %252 = vmatpush1.msra.mxu0 0.0
  %253 = vmatprep.subr.mxu0 0.0
  %254 = vmatpush1.msra.mxu0 0.0
  %255 = vmatprep.subr.mxu0 0.0
  %256 = vmatpush1.msra.mxu0 0.0
  %257 = vmatprep.subr.mxu0 0.0
  %258 = vmatpush1.msra.mxu0 0.0
  %259 = vmatprep.subr.mxu0 0.0
  %260 = vmatpush1.msra.mxu0 0.0
  %261 = vmatprep.subr.mxu0 0.0
  %262 = vmatpush1.msra.mxu0 0.0
  %263 = vmatprep.subr.mxu0 0.0
  %264 = vmatpush1.msra.mxu0 0.0
  %265 = vmatprep.subr.mxu0 0.0
  %266 = vmatpush1.msra.mxu0 0.0
  %267 = vmatprep.subr.mxu0 0.0
  %268 = vmatpush1.msra.mxu0 0.0
  %269 = vmatprep.subr.mxu0 0.0
  %270 = vmatpush1.msra.mxu0 0.0
  %271 = vmatprep.subr.mxu0 0.0
  %272 = vmatpush1.msra.mxu0 0.0
  %273 = vmatprep.subr.mxu0 %v241
  %274 = vmatpush1.msra.mxu0 %v239
  %275 = vmatprep.subr.mxu0 0.0
  %276 = vmatpush2.msra.mxu0 0.0
  %277 = vmatprep.subr.mxu0 0.0
  %278 = vmatpush2.msra.mxu0 0.0
  %279 = vmatprep.subr.mxu0 0.0
  %280 = vmatpush2.msra.mxu0 0.0
  %281 = vmatprep.subr.mxu0 0.0
  %282 = vmatpush2.msra.mxu0 0.0
  %283 = vmatprep.subr.mxu0 0.0
  %284 = vmatpush2.msra.mxu0 0.0
  %285 = vmatprep.subr.mxu0 0.0
  %286 = vmatpush2.msra.mxu0 0.0
  %287 = vmatprep.subr.mxu0 0.0
  %288 = vmatpush2.msra.mxu0 0.0
  %289 = vmatprep.subr.mxu0 0.0
  %290 = vmatpush2.msra.mxu0 0.0
  %291 = vmatprep.subr.mxu0 0.0
  %292 = vmatpush2.msra.mxu0 0.0
  %293 = vmatprep.subr.mxu0 0.0
  %294 = vmatpush2.msra.mxu0 0.0
  %295 = vmatprep.subr.mxu0 0.0
  %296 = vmatpush2.msra.mxu0 0.0
  %297 = vmatprep.subr.mxu0 0.0
  %298 = vmatpush2.msra.mxu0 0.0
  %299 = vmatprep.subr.mxu0 0.0
  %300 = vmatpush2.msra.mxu0 0.0
  %301 = vmatprep.subr.mxu0 0.0
  %302 = vmatpush2.msra.mxu0 0.0
  %303 = vmatprep.subr.mxu0 0.0
  %304 = vmatpush2.msra.mxu0 0.0
  %305 = vmatprep.subr.mxu0 0.0
  %306 = vmatpush2.msra.mxu0 0.0
  %307 = vmatprep.mubr.f32.mxu0 0.0
  %308 = vmatmul.mubr.f32.gmra.mxu0 %v228
  %v309 = vpop.f32.mrf.mxu0
  %v310 = vadd.f32 %v203, %v309
  %v311 = vpop.f32.mrf.mxu0
  %v312 = vadd.f32 %v205, %v311
  %313 = vmatprep.mubr.f32.mxu0 0.0
  %314 = vmatmul.mubr.f32.gmra.mxu0 %v231
  %v315 = vpop.f32.mrf.mxu0
  %v316 = vadd.f32 %v209, %v315
  %v317 = vpop.f32.mrf.mxu0
  %v318 = vadd.f32 %v211, %v317
  %319 = vmatprep.mubr.f32.mxu0 0.0
  %320 = vmatmul.mubr.f32.gmra.mxu0 %v234
  %v321 = vpop.f32.mrf.mxu0
  %v322 = vadd.f32 %v215, %v321
  %v323 = vpop.f32.mrf.mxu0
  %v324 = vadd.f32 %v217, %v323
  %325 = vmatprep.mubr.f32.mxu0 0.0
  %326 = vmatmul.mubr.f32.gmra.mxu0 %v237
  %v327 = vpop.f32.mrf.mxu0
  %v328 = vadd.f32 %v221, %v327
  %v329 = vpop.f32.mrf.mxu0
  %v330 = vadd.f32 %v223, %v329
  %331 = vdwg.mxu0
  %s332 = scalar_lea.vmem %s1, 16
  %v333 = vld [vmem:[%s332] sm:$0xff]
  %v335 = vcombine.high %v333, %v333
  %v337 = vsel %vm118, %v109, 0
  %v340 = vsel %vm118, %v110, 0
  %v343 = vsel %vm118, %v111, 0
  %v346 = vsel %vm118, %v112, 0
  %v348 = vsel %vm131, %v333, 0
  %v350 = vsel %vm131, %v335, 0
  %352 = vmatprep.subr.mxu0 0.0
  %353 = vmatpush1.msra.mxu0 0.0
  %354 = vmatprep.subr.mxu0 0.0
  %355 = vmatpush1.msra.mxu0 0.0
  %356 = vmatprep.subr.mxu0 0.0
  %357 = vmatpush1.msra.mxu0 0.0
  %358 = vmatprep.subr.mxu0 0.0
  %359 = vmatpush1.msra.mxu0 0.0
  %360 = vmatprep.subr.mxu0 0.0
  %361 = vmatpush1.msra.mxu0 0.0
  %362 = vmatprep.subr.mxu0 0.0
  %363 = vmatpush1.msra.mxu0 0.0
  %364 = vmatprep.subr.mxu0 0.0
  %365 = vmatpush1.msra.mxu0 0.0
  %366 = vmatprep.subr.mxu0 0.0
  %367 = vmatpush1.msra.mxu0 0.0
  %368 = vmatprep.subr.mxu0 0.0
  %369 = vmatpush1.msra.mxu0 0.0
  %370 = vmatprep.subr.mxu0 0.0
  %371 = vmatpush1.msra.mxu0 0.0
  %372 = vmatprep.subr.mxu0 0.0
  %373 = vmatpush1.msra.mxu0 0.0
  %374 = vmatprep.subr.mxu0 0.0
  %375 = vmatpush1.msra.mxu0 0.0
  %376 = vmatprep.subr.mxu0 0.0
  %377 = vmatpush1.msra.mxu0 0.0
  %378 = vmatprep.subr.mxu0 0.0
  %379 = vmatpush1.msra.mxu0 0.0
  %380 = vmatprep.subr.mxu0 0.0
  %381 = vmatpush1.msra.mxu0 0.0
  %382 = vmatprep.subr.mxu0 %v350
  %383 = vmatpush1.msra.mxu0 %v348
  %384 = vmatprep.subr.mxu0 0.0
  %385 = vmatpush2.msra.mxu0 0.0
  %386 = vmatprep.subr.mxu0 0.0
  %387 = vmatpush2.msra.mxu0 0.0
  %388 = vmatprep.subr.mxu0 0.0
  %389 = vmatpush2.msra.mxu0 0.0
  %390 = vmatprep.subr.mxu0 0.0
  %391 = vmatpush2.msra.mxu0 0.0
  %392 = vmatprep.subr.mxu0 0.0
  %393 = vmatpush2.msra.mxu0 0.0
  %394 = vmatprep.subr.mxu0 0.0
  %395 = vmatpush2.msra.mxu0 0.0
  %396 = vmatprep.subr.mxu0 0.0
  %397 = vmatpush2.msra.mxu0 0.0
  %398 = vmatprep.subr.mxu0 0.0
  %399 = vmatpush2.msra.mxu0 0.0
  %400 = vmatprep.subr.mxu0 0.0
  %401 = vmatpush2.msra.mxu0 0.0
  %402 = vmatprep.subr.mxu0 0.0
  %403 = vmatpush2.msra.mxu0 0.0
  %404 = vmatprep.subr.mxu0 0.0
  %405 = vmatpush2.msra.mxu0 0.0
  %406 = vmatprep.subr.mxu0 0.0
  %407 = vmatpush2.msra.mxu0 0.0
  %408 = vmatprep.subr.mxu0 0.0
  %409 = vmatpush2.msra.mxu0 0.0
  %410 = vmatprep.subr.mxu0 0.0
  %411 = vmatpush2.msra.mxu0 0.0
  %412 = vmatprep.subr.mxu0 0.0
  %413 = vmatpush2.msra.mxu0 0.0
  %414 = vmatprep.subr.mxu0 0.0
  %415 = vmatpush2.msra.mxu0 0.0
  %416 = vmatprep.mubr.f32.mxu0 0.0
  %417 = vmatmul.mubr.f32.gmra.mxu0 %v337
  %v418 = vpop.f32.mrf.mxu0
  %v419 = vadd.f32 0.0, %v418
  %v420 = vpop.f32.mrf.mxu0
  %v421 = vadd.f32 0.0, %v420
  %422 = vmatprep.mubr.f32.mxu0 0.0
  %423 = vmatmul.mubr.f32.gmra.mxu0 %v340
  %v424 = vpop.f32.mrf.mxu0
  %v425 = vadd.f32 0.0, %v424
  %v426 = vpop.f32.mrf.mxu0
  %v427 = vadd.f32 0.0, %v426
  %428 = vmatprep.mubr.f32.mxu0 0.0
  %429 = vmatmul.mubr.f32.gmra.mxu0 %v343
  %v430 = vpop.f32.mrf.mxu0
  %v431 = vadd.f32 0.0, %v430
  %v432 = vpop.f32.mrf.mxu0
  %v433 = vadd.f32 0.0, %v432
  %434 = vmatprep.mubr.f32.mxu0 0.0
  %435 = vmatmul.mubr.f32.gmra.mxu0 %v346
  %v436 = vpop.f32.mrf.mxu0
  %v437 = vadd.f32 0.0, %v436
  %v438 = vpop.f32.mrf.mxu0
  %v439 = vadd.f32 0.0, %v438
  %440 = vdwg.mxu0
  %v441 = vadd.f32 %v310, %v419
  %v442 = vadd.f32 %v312, %v421
  %v443 = vadd.f32 %v316, %v425
  %v444 = vadd.f32 %v318, %v427
  %v445 = vadd.f32 %v322, %v431
  %v446 = vadd.f32 %v324, %v433
  %v447 = vadd.f32 %v328, %v437
  %v448 = vadd.f32 %v330, %v439
  %v449 = vld [vmem:[%s2] sm:$0x1]
  %v451 = vlaneseq
  %v452 = vshrl.u32 %v451, 7
  %v453 = vsub.s32 0, %v452
  %v454 = vrot.slane %v449, %v453
  %v456 = vadd.f32 %v441, %v454
  %v457 = vadd.f32 %v443, %v454
  %v458 = vadd.f32 %v445, %v454
  %v459 = vadd.f32 %v447, %v454
  %v460 = vmax.f32 %v456, 0.0
  %v461 = vmax.f32 %v457, 0.0
  %v462 = vmax.f32 %v458, 0.0
  %v463 = vmax.f32 %v459, 0.0
  %v464 = vrot.slane %v460, 7
  %v465 = vrot.slane %v461, 7
  %v466 = vrot.slane %v462, 7
  %v467 = vrot.slane %v463, 7
  %v468 = vsel %vm87, %v466, %v467
  %v469 = vsel %vm87, %v465, %v466
  %v470 = vsel %vm87, %v464, %v465
  %v471 = vsel %vm87, %v467, %v464
  %v472 = vsel %vm79, 0.0, %v471
  %v473 = vsel %vm80, 0.0, %v470
  %v474 = vsel %vm81, 0.0, %v469
  %v475 = vsel %vm82, 0.0, %v468
  %v476 = vrot.slane %v460, 1
  %v477 = vrot.slane %v461, 1
  %v478 = vrot.slane %v462, 1
  %v479 = vrot.slane %v463, 1
  %v480 = vsel %vm104, %v478, %v479
  %v481 = vsel %vm104, %v477, %v478
  %v482 = vsel %vm104, %v476, %v477
  %v483 = vsel %vm104, %v479, %v476
  %v484 = vsel %vm96, 0.0, %v482
  %v485 = vsel %vm97, 0.0, %v481
  %v486 = vsel %vm98, 0.0, %v480
  %v487 = vsel %vm99, 0.0, %v483
  %v488 = vld [vmem:[%s3] sm:$0xff]
  %s489 = scalar_lea.vmem %s3, 8
  %v490 = vld [vmem:[%s489] sm:$0xff]
  %vm491 = vcmask 64512
  %v493 = vsel %vm491, %v460, 0
  %v496 = vsel %vm491, %v461, 0
  %v499 = vsel %vm491, %v462, 0
  %v502 = vsel %vm491, %v463, 0
  %504 = vmatprep.subr.mxu0 0.0
  %505 = vmatpush1.msra.mxu0 0.0
  %506 = vmatprep.subr.mxu0 0.0
  %507 = vmatpush1.msra.mxu0 0.0
  %508 = vmatprep.subr.mxu0 0.0
  %509 = vmatpush1.msra.mxu0 0.0
  %510 = vmatprep.subr.mxu0 0.0
  %511 = vmatpush1.msra.mxu0 0.0
  %512 = vmatprep.subr.mxu0 0.0
  %513 = vmatpush1.msra.mxu0 0.0
  %514 = vmatprep.subr.mxu0 0.0
  %515 = vmatpush1.msra.mxu0 0.0
  %516 = vmatprep.subr.mxu0 0.0
  %517 = vmatpush1.msra.mxu0 0.0
  %518 = vmatprep.subr.mxu0 0.0
  %519 = vmatpush1.msra.mxu0 0.0
  %520 = vmatprep.subr.mxu0 0.0
  %521 = vmatpush1.msra.mxu0 0.0
  %522 = vmatprep.subr.mxu0 0.0
  %523 = vmatpush1.msra.mxu0 0.0
  %524 = vmatprep.subr.mxu0 0.0
  %525 = vmatpush1.msra.mxu0 0.0
  %526 = vmatprep.subr.mxu0 0.0
  %527 = vmatpush1.msra.mxu0 0.0
  %528 = vmatprep.subr.mxu0 0.0
  %529 = vmatpush1.msra.mxu0 0.0
  %530 = vmatprep.subr.mxu0 0.0
  %531 = vmatpush1.msra.mxu0 0.0
  %532 = vmatprep.subr.mxu0 0.0
  %533 = vmatpush1.msra.mxu0 0.0
  %534 = vmatprep.subr.mxu0 0.0
  %535 = vmatpush1.msra.mxu0 %v490
  %536 = vmatprep.subr.mxu0 0.0
  %537 = vmatpush2.msra.mxu0 0.0
  %538 = vmatprep.subr.mxu0 0.0
  %539 = vmatpush2.msra.mxu0 0.0
  %540 = vmatprep.subr.mxu0 0.0
  %541 = vmatpush2.msra.mxu0 0.0
  %542 = vmatprep.subr.mxu0 0.0
  %543 = vmatpush2.msra.mxu0 0.0
  %544 = vmatprep.subr.mxu0 0.0
  %545 = vmatpush2.msra.mxu0 0.0
  %546 = vmatprep.subr.mxu0 0.0
  %547 = vmatpush2.msra.mxu0 0.0
  %548 = vmatprep.subr.mxu0 0.0
  %549 = vmatpush2.msra.mxu0 0.0
  %550 = vmatprep.subr.mxu0 0.0
  %551 = vmatpush2.msra.mxu0 0.0
  %552 = vmatprep.subr.mxu0 0.0
  %553 = vmatpush2.msra.mxu0 0.0
  %554 = vmatprep.subr.mxu0 0.0
  %555 = vmatpush2.msra.mxu0 0.0
  %556 = vmatprep.subr.mxu0 0.0
  %557 = vmatpush2.msra.mxu0 0.0
  %558 = vmatprep.subr.mxu0 0.0
  %559 = vmatpush2.msra.mxu0 0.0
  %560 = vmatprep.subr.mxu0 0.0
  %561 = vmatpush2.msra.mxu0 0.0
  %562 = vmatprep.subr.mxu0 0.0
  %563 = vmatpush2.msra.mxu0 0.0
  %564 = vmatprep.subr.mxu0 0.0
  %565 = vmatpush2.msra.mxu0 0.0
  %566 = vmatprep.subr.mxu0 0.0
  %567 = vmatpush2.msra.mxu0 0.0
  %568 = vmatprep.mubr.f32.mxu0 0.0
  %569 = vmatmul.mubr.f32.gmra.mxu0 %v493
  %v570 = vpop.f32.mrf.mxu0
  %v571 = vadd.f32 0.0, %v570
  %v572 = vpop.f32.mrf.mxu0
  %573 = vmatprep.mubr.f32.mxu0 0.0
  %574 = vmatmul.mubr.f32.gmra.mxu0 %v496
  %v575 = vpop.f32.mrf.mxu0
  %v576 = vadd.f32 0.0, %v575
  %v577 = vpop.f32.mrf.mxu0
  %578 = vmatprep.mubr.f32.mxu0 0.0
  %579 = vmatmul.mubr.f32.gmra.mxu0 %v499
  %v580 = vpop.f32.mrf.mxu0
  %v581 = vadd.f32 0.0, %v580
  %v582 = vpop.f32.mrf.mxu0
  %583 = vmatprep.mubr.f32.mxu0 0.0
  %584 = vmatmul.mubr.f32.gmra.mxu0 %v502
  %v585 = vpop.f32.mrf.mxu0
  %v586 = vadd.f32 0.0, %v585
  %v587 = vpop.f32.mrf.mxu0
  %588 = vdwg.mxu0
  %v590 = vsel %vm491, %v472, 0
  %v593 = vsel %vm491, %v473, 0
  %v596 = vsel %vm491, %v474, 0
  %v599 = vsel %vm491, %v475, 0
  %601 = vmatprep.subr.mxu0 0.0
  %602 = vmatpush1.msra.mxu0 0.0
  %603 = vmatprep.subr.mxu0 0.0
  %604 = vmatpush1.msra.mxu0 0.0
  %605 = vmatprep.subr.mxu0 0.0
  %606 = vmatpush1.msra.mxu0 0.0
  %607 = vmatprep.subr.mxu0 0.0
  %608 = vmatpush1.msra.mxu0 0.0
  %609 = vmatprep.subr.mxu0 0.0
  %610 = vmatpush1.msra.mxu0 0.0
  %611 = vmatprep.subr.mxu0 0.0
  %612 = vmatpush1.msra.mxu0 0.0
  %613 = vmatprep.subr.mxu0 0.0
  %614 = vmatpush1.msra.mxu0 0.0
  %615 = vmatprep.subr.mxu0 0.0
  %616 = vmatpush1.msra.mxu0 0.0
  %617 = vmatprep.subr.mxu0 0.0
  %618 = vmatpush1.msra.mxu0 0.0
  %619 = vmatprep.subr.mxu0 0.0
  %620 = vmatpush1.msra.mxu0 0.0
  %621 = vmatprep.subr.mxu0 0.0
  %622 = vmatpush1.msra.mxu0 0.0
  %623 = vmatprep.subr.mxu0 0.0
  %624 = vmatpush1.msra.mxu0 0.0
  %625 = vmatprep.subr.mxu0 0.0
  %626 = vmatpush1.msra.mxu0 0.0
  %627 = vmatprep.subr.mxu0 0.0
  %628 = vmatpush1.msra.mxu0 0.0
  %629 = vmatprep.subr.mxu0 0.0
  %630 = vmatpush1.msra.mxu0 0.0
  %631 = vmatprep.subr.mxu0 0.0
  %632 = vmatpush1.msra.mxu0 %v488
  %633 = vmatprep.subr.mxu0 0.0
  %634 = vmatpush2.msra.mxu0 0.0
  %635 = vmatprep.subr.mxu0 0.0
  %636 = vmatpush2.msra.mxu0 0.0
  %637 = vmatprep.subr.mxu0 0.0
  %638 = vmatpush2.msra.mxu0 0.0
  %639 = vmatprep.subr.mxu0 0.0
  %640 = vmatpush2.msra.mxu0 0.0
  %641 = vmatprep.subr.mxu0 0.0
  %642 = vmatpush2.msra.mxu0 0.0
  %643 = vmatprep.subr.mxu0 0.0
  %644 = vmatpush2.msra.mxu0 0.0
  %645 = vmatprep.subr.mxu0 0.0
  %646 = vmatpush2.msra.mxu0 0.0
  %647 = vmatprep.subr.mxu0 0.0
  %648 = vmatpush2.msra.mxu0 0.0
  %649 = vmatprep.subr.mxu0 0.0
  %650 = vmatpush2.msra.mxu0 0.0
  %651 = vmatprep.subr.mxu0 0.0
  %652 = vmatpush2.msra.mxu0 0.0
  %653 = vmatprep.subr.mxu0 0.0
  %654 = vmatpush2.msra.mxu0 0.0
  %655 = vmatprep.subr.mxu0 0.0
  %656 = vmatpush2.msra.mxu0 0.0
  %657 = vmatprep.subr.mxu0 0.0
  %658 = vmatpush2.msra.mxu0 0.0
  %659 = vmatprep.subr.mxu0 0.0
  %660 = vmatpush2.msra.mxu0 0.0
  %661 = vmatprep.subr.mxu0 0.0
  %662 = vmatpush2.msra.mxu0 0.0
  %663 = vmatprep.subr.mxu0 0.0
  %664 = vmatpush2.msra.mxu0 0.0
  %665 = vmatprep.mubr.f32.mxu0 0.0
  %666 = vmatmul.mubr.f32.gmra.mxu0 %v590
  %v667 = vpop.f32.mrf.mxu0
  %v668 = vadd.f32 %v571, %v667
  %v669 = vpop.f32.mrf.mxu0
  %670 = vmatprep.mubr.f32.mxu0 0.0
  %671 = vmatmul.mubr.f32.gmra.mxu0 %v593
  %v672 = vpop.f32.mrf.mxu0
  %v673 = vadd.f32 %v576, %v672
  %v674 = vpop.f32.mrf.mxu0
  %675 = vmatprep.mubr.f32.mxu0 0.0
  %676 = vmatmul.mubr.f32.gmra.mxu0 %v596
  %v677 = vpop.f32.mrf.mxu0
  %v678 = vadd.f32 %v581, %v677
  %v679 = vpop.f32.mrf.mxu0
  %680 = vmatprep.mubr.f32.mxu0 0.0
  %681 = vmatmul.mubr.f32.gmra.mxu0 %v599
  %v682 = vpop.f32.mrf.mxu0
  %v683 = vadd.f32 %v586, %v682
  %v684 = vpop.f32.mrf.mxu0
  %685 = vdwg.mxu0
  %s686 = scalar_lea.vmem %s3, 16
  %v687 = vld [vmem:[%s686] sm:$0xff]
  %v689 = vsel %vm491, %v484, 0
  %v692 = vsel %vm491, %v485, 0
  %v695 = vsel %vm491, %v486, 0
  %v698 = vsel %vm491, %v487, 0
  %700 = vmatprep.subr.mxu0 0.0
  %701 = vmatpush1.msra.mxu0 0.0
  %702 = vmatprep.subr.mxu0 0.0
  %703 = vmatpush1.msra.mxu0 0.0
  %704 = vmatprep.subr.mxu0 0.0
  %705 = vmatpush1.msra.mxu0 0.0
  %706 = vmatprep.subr.mxu0 0.0
  %707 = vmatpush1.msra.mxu0 0.0
  %708 = vmatprep.subr.mxu0 0.0
  %709 = vmatpush1.msra.mxu0 0.0
  %710 = vmatprep.subr.mxu0 0.0
  %711 = vmatpush1.msra.mxu0 0.0
  %712 = vmatprep.subr.mxu0 0.0
  %713 = vmatpush1.msra.mxu0 0.0
  %714 = vmatprep.subr.mxu0 0.0
  %715 = vmatpush1.msra.mxu0 0.0
  %716 = vmatprep.subr.mxu0 0.0
  %717 = vmatpush1.msra.mxu0 0.0
  %718 = vmatprep.subr.mxu0 0.0
  %719 = vmatpush1.msra.mxu0 0.0
  %720 = vmatprep.subr.mxu0 0.0
  %721 = vmatpush1.msra.mxu0 0.0
  %722 = vmatprep.subr.mxu0 0.0
  %723 = vmatpush1.msra.mxu0 0.0
  %724 = vmatprep.subr.mxu0 0.0
  %725 = vmatpush1.msra.mxu0 0.0
  %726 = vmatprep.subr.mxu0 0.0
  %727 = vmatpush1.msra.mxu0 0.0
  %728 = vmatprep.subr.mxu0 0.0
  %729 = vmatpush1.msra.mxu0 0.0
  %730 = vmatprep.subr.mxu0 0.0
  %731 = vmatpush1.msra.mxu0 %v687
  %732 = vmatprep.subr.mxu0 0.0
  %733 = vmatpush2.msra.mxu0 0.0
  %734 = vmatprep.subr.mxu0 0.0
  %735 = vmatpush2.msra.mxu0 0.0
  %736 = vmatprep.subr.mxu0 0.0
  %737 = vmatpush2.msra.mxu0 0.0
  %738 = vmatprep.subr.mxu0 0.0
  %739 = vmatpush2.msra.mxu0 0.0
  %740 = vmatprep.subr.mxu0 0.0
  %741 = vmatpush2.msra.mxu0 0.0
  %742 = vmatprep.subr.mxu0 0.0
  %743 = vmatpush2.msra.mxu0 0.0
  %744 = vmatprep.subr.mxu0 0.0
  %745 = vmatpush2.msra.mxu0 0.0
  %746 = vmatprep.subr.mxu0 0.0
  %747 = vmatpush2.msra.mxu0 0.0
  %748 = vmatprep.subr.mxu0 0.0
  %749 = vmatpush2.msra.mxu0 0.0
  %750 = vmatprep.subr.mxu0 0.0
  %751 = vmatpush2.msra.mxu0 0.0
  %752 = vmatprep.subr.mxu0 0.0
  %753 = vmatpush2.msra.mxu0 0.0
  %754 = vmatprep.subr.mxu0 0.0
  %755 = vmatpush2.msra.mxu0 0.0
  %756 = vmatprep.subr.mxu0 0.0
  %757 = vmatpush2.msra.mxu0 0.0
  %758 = vmatprep.subr.mxu0 0.0
  %759 = vmatpush2.msra.mxu0 0.0
  %760 = vmatprep.subr.mxu0 0.0
  %761 = vmatpush2.msra.mxu0 0.0
  %762 = vmatprep.subr.mxu0 0.0
  %763 = vmatpush2.msra.mxu0 0.0
  %764 = vmatprep.mubr.f32.mxu0 0.0
  %765 = vmatmul.mubr.f32.gmra.mxu0 %v689
  %v766 = vpop.f32.mrf.mxu0
  %v767 = vadd.f32 0.0, %v766
  %v768 = vpop.f32.mrf.mxu0
  %769 = vmatprep.mubr.f32.mxu0 0.0
  %770 = vmatmul.mubr.f32.gmra.mxu0 %v692
  %v771 = vpop.f32.mrf.mxu0
  %v772 = vadd.f32 0.0, %v771
  %v773 = vpop.f32.mrf.mxu0
  %774 = vmatprep.mubr.f32.mxu0 0.0
  %775 = vmatmul.mubr.f32.gmra.mxu0 %v695
  %v776 = vpop.f32.mrf.mxu0
  %v777 = vadd.f32 0.0, %v776
  %v778 = vpop.f32.mrf.mxu0
  %779 = vmatprep.mubr.f32.mxu0 0.0
  %780 = vmatmul.mubr.f32.gmra.mxu0 %v698
  %v781 = vpop.f32.mrf.mxu0
  %v782 = vadd.f32 0.0, %v781
  %v783 = vpop.f32.mrf.mxu0
  %784 = vdwg.mxu0
  %v785 = vadd.f32 %v668, %v767
  %v786 = vadd.f32 %v673, %v772
  %v787 = vadd.f32 %v678, %v777
  %v788 = vadd.f32 %v683, %v782
  %v789 = vld [vmem:[%s4] sm:$0x1]
  %v791 = vlaneseq
  %v792 = vshrl.u32 %v791, 7
  %v793 = vsub.s32 0, %v792
  %v794 = vrot.slane %v789, %v793
  %v796 = vadd.f32 %v785, %v794
  %v797 = vadd.f32 %v786, %v794
  %v798 = vadd.f32 %v787, %v794
  %v799 = vadd.f32 %v788, %v794
  %v800 = vmax.f32 %v796, 0.0
  %v801 = vmax.f32 %v797, 0.0
  %v802 = vmax.f32 %v798, 0.0
  %v803 = vmax.f32 %v799, 0.0
  %v804 = vadd.f32 %v442, %v800
  %v805 = vadd.f32 %v444, %v801
  %v806 = vadd.f32 %v446, %v802
  %v807 = vadd.f32 %v448, %v803
  %808 = vst.msk [vmem:[%s5] sm:$0xff] %vm491, %v804
  %809 = vst.msk [vmem:[%s5 + $0x8] sm:$0xff] %vm491, %v805
  %810 = vst.msk [vmem:[%s5 + $0x10] sm:$0xff] %vm491, %v806
  %811 = vst.msk [vmem:[%s5 + $0x18] sm:$0xff] %vm491, %v807
  %v812 = vsel %vm491, %v804, 0.0
  %v813 = vsel %vm491, %v805, 0.0
  %v814 = vadd.f32 %v812, %v813
  %v815 = vsel %vm491, %v806, 0.0
  %v816 = vadd.f32 %v814, %v815
  %v817 = vsel %vm491, %v807, 0.0
  %v818 = vadd.f32 %v816, %v817
  %v819 = vrot.slane %v818, 4
  %v820 = vadd.f32 %v818, %v819
  %v821 = vrot.slane %v820, 2
  %v822 = vadd.f32 %v820, %v821
  %v823 = vrot.slane %v822, 1
  %v824 = vadd.f32 %v822, %v823
  %vm825 = vcmask 57344
  %826 = vst.msk [vmem:[%s6] sm:$0x1] %vm825, %v824
  %v827 = vmul.f32 %v804, %v804
  %v828 = vmul.f32 %v805, %v805
  %v829 = vmul.f32 %v806, %v806
  %v830 = vmul.f32 %v807, %v807
  %v831 = vsel %vm491, %v827, 0.0
  %v832 = vsel %vm491, %v828, 0.0
  %v833 = vadd.f32 %v831, %v832
  %v834 = vsel %vm491, %v829, 0.0
  %v835 = vadd.f32 %v833, %v834
  %v836 = vsel %vm491, %v830, 0.0
  %v837 = vadd.f32 %v835, %v836
  %v838 = vrot.slane %v837, 4
  %v839 = vadd.f32 %v837, %v838
  %v840 = vrot.slane %v839, 2
  %v841 = vadd.f32 %v839, %v840
  %v842 = vrot.slane %v841, 1
  %v843 = vadd.f32 %v841, %v842
  %844 = vst.msk [vmem:[%s6 + $0x1] sm:$0x1] %vm825, %v843
  // Predicated region
  $region22: #{residual_block_forward.1} parent=0 // pred_check
    _
  $region23: #{residual_block_forward.1} parent=0 // pred_check_branch
    %846 = sbr.rel (0) target = $region25
  $region24: #{residual_block_forward.1} parent=0 // pred_region
    _
  $region25: #{residual_block_forward.1} parent=0 // pred_fallthru
    _
  // Predicated region
  $region26: #{residual_block_forward.1} parent=0 // pred_check
    _
  $region27: #{residual_block_forward.1} parent=0 // pred_check_branch
    %848 = sbr.rel (0) target = $region29
  $region28: #{residual_block_forward.1} parent=0 // pred_region
    _
  $region29: #{residual_block_forward.1} parent=0 // pred_fallthru
    _
  // Predicated region
  $region30: #{residual_block_forward.1} parent=0 // pred_check
    _
  $region31: #{residual_block_forward.1} parent=0 // pred_check_branch
    %850 = sbr.rel (0) target = $region33
  $region32: #{residual_block_forward.1} parent=0 // pred_region
    _
  $region33: #{residual_block_forward.1} parent=0 // pred_fallthru
    _
  // Predicated region
  $region34: #{residual_block_forward.1} parent=0 // pred_check
    _
  $region35: #{residual_block_forward.1} parent=0 // pred_check_branch
    %852 = sbr.rel (0) target = $region37
  $region36: #{residual_block_forward.1} parent=0 // pred_region
    _
  $region37: #{residual_block_forward.1} parent=0 // pred_fallthru
    _

</llo_original>
